<compile_context>
chip_gen: v7x
topology: tpu7x:2x2x1
jax: 0.10.0
libtpu: 0.0.40
codegen_flags: <defaults>
</compile_context>

<pallas_src>
import functools

import jax
import jax.numpy as jnp
from jax import lax
from jax.experimental import pallas as pl
from jax.experimental.pallas import tpu as pltpu

LANES = 128
_CHUNK_ROWS = 512   # in-kernel accumulation chunk (keeps intermediates small)


def _round_up(x, m):
    return ((x + m - 1) // m) * m


def _cdiv(a, b):
    return -(-a // b)


def _row_align(*dtypes):
    # sublane packing: 8 rows for 4-byte dtypes, 16 for bf16/fp16, 32 for 1-byte
    itemsize = min(jnp.dtype(d).itemsize for d in dtypes)
    return max(32 // itemsize, 8)


def _lane_split(x):
    """Flatten to a lane-dense (rows, 128) slab + a <128-element tail (no pad copy)."""
    flat = jnp.ravel(x)
    n = flat.size
    rows = n // LANES
    if n % LANES == 0:
        return flat.reshape(rows, LANES), flat[:0]
    main = flat[: rows * LANES].reshape(rows, LANES)
    return main, flat[rows * LANES:]


def _total_loss_tile_kernel(pred_ref, gt_ref, disp3_ref, lower_ref, upper_ref,
                            out_ref, *,
                            one_minus_inv_scale,
                            bf, bh, chunk_full, chunk_half,
                            rows_full, rows_half,
                            mask_full, mask_half):
    pid = pl.program_id(0)
    f32 = jnp.float32
    zero_row = jnp.zeros((1, LANES), f32)

    # ---------------- full-res stream: masked Smooth-L1 partials ---------------
    def full_chunk(c, carry):
        sl1_acc, cnt_acc = carry
        r0 = pl.multiple_of(c * chunk_full, chunk_full)
        pred = pred_ref[pl.ds(r0, chunk_full), :].astype(f32)
        gt = gt_ref[pl.ds(r0, chunk_full), :].astype(f32)
        valid = jnp.logical_and(gt < 192.0, gt > 0.0)
        if mask_full:  # mask ragged last block rows (static decision at trace time)
            rid = lax.broadcasted_iota(jnp.int32, (chunk_full, LANES), 0)
            valid = jnp.logical_and(valid, rid + (pid * bf + r0) < rows_full)
        d = pred - gt
        ad = jnp.abs(d)
        sl1 = jnp.where(ad < 1.0, 0.5 * d * d, ad - 0.5)
        sl1_acc = sl1_acc + jnp.sum(jnp.where(valid, sl1, 0.0), axis=0, keepdims=True)
        cnt_acc = cnt_acc + jnp.sum(valid.astype(f32), axis=0, keepdims=True)
        return sl1_acc, cnt_acc

    sl1_row, cnt_row = lax.fori_loop(0, bf // chunk_full, full_chunk,
                                     (zero_row, zero_row), unroll=True)

    # ---------------- half-res stream: searching-range partials ----------------
    def half_chunk(c, carry):
        ln_acc, lc_acc, un_acc, uc_acc, epe_acc = carry
        r0 = pl.multiple_of(c * chunk_half, chunk_half)
        disp3 = disp3_ref[pl.ds(r0, chunk_half), :].astype(f32)
        lower = lower_ref[pl.ds(r0, chunk_half), :].astype(f32)
        upper = upper_ref[pl.ds(r0, chunk_half), :].astype(f32)
        if mask_half:  # ragged last block + fully-dead (clamped-index) blocks
            rid = lax.broadcasted_iota(jnp.int32, (chunk_half, LANES), 0)
            v = rid + (pid * bh + r0) < rows_half
            disp3 = jnp.where(v, disp3, 0.0)
            lower = jnp.where(v, lower, 0.0)
            upper = jnp.where(v, upper, 0.0)
        base = disp3 * one_minus_inv_scale           # disp3*(1 - 1/scale)
        relu_lower = jnp.maximum(base - lower, 0.0)
        relu_upper = jnp.maximum(-base - upper, 0.0)
        ln_acc = ln_acc + jnp.sum(relu_lower, axis=0, keepdims=True)
        lc_acc = lc_acc + jnp.sum((relu_lower > 0.0).astype(f32), axis=0, keepdims=True)
        un_acc = un_acc + jnp.sum(relu_upper, axis=0, keepdims=True)
        uc_acc = uc_acc + jnp.sum((relu_upper > 0.0).astype(f32), axis=0, keepdims=True)
        # |upper_th - lower_th| = |(disp3+upper) - (disp3-lower)| = |lower + upper|
        epe_acc = epe_acc + jnp.sum(jnp.abs(lower + upper), axis=0, keepdims=True)
        return ln_acc, lc_acc, un_acc, uc_acc, epe_acc

    low_num, low_cnt, up_num, up_cnt, epe = lax.fori_loop(
        0, bh // chunk_half, half_chunk, (zero_row,) * 5, unroll=True)

    # Per-block partial-sum rows (lane-dense (8,128) output block).
    out_ref[0:1, :] = sl1_row
    out_ref[1:2, :] = cnt_row
    out_ref[2:3, :] = low_num
    out_ref[3:4, :] = low_cnt
    out_ref[4:5, :] = up_num
    out_ref[5:6, :] = up_cnt
    out_ref[6:7, :] = epe
    # row 7 intentionally left unwritten — never read by the wrapper.


def total_loss(pred_disp, gt_disp, lower_offset_map, upper_offset_map, disp3,
               *, alpha=0.9, disp_emphasis=3.0, full_block_rows=8192):
    assert pred_disp.shape[-1] == gt_disp.shape[-1], "same-res disp-loss branch only"
    assert disp3.shape[-1] != gt_disp.shape[-1], "scale must be defined (see PyTorch module)"
    assert gt_disp.shape[-1] % disp3.shape[-1] == 0, \
        "gt width must be an integer multiple of disp3 width"
    scale = gt_disp.shape[-1] // disp3.shape[-1]
    one_minus_inv_scale = 1.0 - 1.0 / float(scale)

    n_full = int(pred_disp.size)
    n_half = int(disp3.size)

    pred2, pred_t = _lane_split(pred_disp)
    gt2, gt_t = _lane_split(gt_disp)
    d3, d3_t = _lane_split(disp3)
    lo, lo_t = _lane_split(lower_offset_map)
    up, up_t = _lane_split(upper_offset_map)

    rows_full = pred2.shape[0]
    rows_half = d3.shape[0]
    assert rows_full >= 1 and rows_half >= 1, "inputs must have at least 128 elements"

    # ---- block sizing -------------------------------------------------------
    align_f = _row_align(pred2.dtype, gt2.dtype)
    align_h = _row_align(d3.dtype, lo.dtype, up.dtype)

    # Clamp so the grid keeps >= 2 steps (v7x megacore) and never exceeds the data.
    bf = min(int(full_block_rows), _round_up(_cdiv(rows_full, 2), align_f))
    bf = min(_round_up(bf, align_f), _round_up(rows_full, align_f))
    if bf > _CHUNK_ROWS:
        bf = _round_up(bf, _CHUNK_ROWS)
        chunk_full = _CHUNK_ROWS
    else:
        chunk_full = bf
    grid = _cdiv(rows_full, bf)

    # Half-res block rows derived from the real full/half ratio (any scale).
    bh = _round_up(_cdiv(rows_half, grid), align_h)
    if bh > _CHUNK_ROWS:
        bh = _round_up(bh, _CHUNK_ROWS)
        chunk_half = _CHUNK_ROWS
    else:
        chunk_half = bh
    grid_half = _cdiv(rows_half, bh)          # <= grid by construction

    mask_full = (grid * bf != rows_full)
    mask_half = (grid * bh != rows_half)

    kernel = functools.partial(
        _total_loss_tile_kernel,
        one_minus_inv_scale=one_minus_inv_scale,
        bf=bf, bh=bh, chunk_full=chunk_full, chunk_half=chunk_half,
        rows_full=rows_full, rows_half=rows_half,
        mask_full=mask_full, mask_half=mask_half)

    full_map = lambda i: (i, 0)
    if grid_half == grid:
        half_map = lambda i: (i, 0)
    else:
        # Grid steps past the last half-res block revisit it; their contribution
        # is masked to zero in-kernel via the global row index.
        half_map = lambda i: (jnp.minimum(i, grid_half - 1), 0)

    # ---- VMEM budget --------------------------------------------------------
    def _buf_bytes(nrows, dt):
        return nrows * LANES * jnp.dtype(dt).itemsize

    footprint = 2 * (_buf_bytes(bf, pred2.dtype) + _buf_bytes(bf, gt2.dtype)
                     + _buf_bytes(bh, d3.dtype) + _buf_bytes(bh, lo.dtype)
                     + _buf_bytes(bh, up.dtype)) + 2 * 8 * LANES * 4
    try:
        vmem_cap = int(pltpu.get_tpu_info().vmem_capacity_bytes)
    except Exception:
        vmem_cap = 64 * 1024 * 1024
    # Leave ~16 MiB headroom for Pallas/Mosaic internal scratch (matters on v7x).
    vmem_limit = max(footprint + 8 * 1024 * 1024, 32 * 1024 * 1024)
    vmem_limit = int(min(vmem_limit,
                         max(vmem_cap - 16 * 1024 * 1024, footprint + 4 * 1024 * 1024)))

    partials = pl.pallas_call(
        kernel,
        grid=(grid,),
        in_specs=[
            pl.BlockSpec((bf, LANES), full_map),
            pl.BlockSpec((bf, LANES), full_map),
            pl.BlockSpec((bh, LANES), half_map),
            pl.BlockSpec((bh, LANES), half_map),
            pl.BlockSpec((bh, LANES), half_map),
        ],
        out_specs=pl.BlockSpec((8, LANES), lambda i: (i, 0)),
        out_shape=jax.ShapeDtypeStruct((grid * 8, LANES), jnp.float32),
        compiler_params=pltpu.CompilerParams(
            dimension_semantics=("parallel",),
            vmem_limit_bytes=vmem_limit),
    )(pred2, gt2, d3, lo, up)

    # ---- <128-element tails in plain JAX ------------------------------------
    pt, gtt = pred_t.astype(jnp.float32), gt_t.astype(jnp.float32)
    tm = jnp.logical_and(gtt < 192.0, gtt > 0.0)
    td = pt - gtt
    tad = jnp.abs(td)
    tsl1 = jnp.where(tad < 1.0, 0.5 * td * td, tad - 0.5)
    tail_sl1 = jnp.sum(jnp.where(tm, tsl1, 0.0))
    tail_cnt = jnp.sum(tm.astype(jnp.float32))

    d3t = d3_t.astype(jnp.float32)
    lot = lo_t.astype(jnp.float32)
    upt = up_t.astype(jnp.float32)
    tbase = d3t * one_minus_inv_scale
    trl = jnp.maximum(tbase - lot, 0.0)
    tru = jnp.maximum(-tbase - upt, 0.0)
    tail_low_num = jnp.sum(trl)
    tail_low_cnt = jnp.sum((trl > 0.0).astype(jnp.float32))
    tail_up_num = jnp.sum(tru)
    tail_up_cnt = jnp.sum((tru > 0.0).astype(jnp.float32))
    tail_epe = jnp.sum(jnp.abs(lot + upt))

    # ---- final combine (tiny) ------------------------------------------------
    # TODO(synk): for >~16M valid pixels do these final sums in float64/Kahan to
    # avoid f32 accumulation drift vs the PyTorch reference.
    sums = partials.reshape(grid, 8, LANES)[:, :7, :].sum(axis=(0, 2))
    sl1_sum = sums[0] + tail_sl1
    mask_cnt = sums[1] + tail_cnt
    low_num = sums[2] + tail_low_num
    low_cnt = sums[3] + tail_low_cnt
    up_num = sums[4] + tail_up_num
    up_cnt = sums[5] + tail_up_cnt
    epe_num = sums[6] + tail_epe

    disp_loss = sl1_sum / mask_cnt          # NaN if gt mask empty (matches PyTorch)
    loss_lower = low_num / (low_cnt + 1e-8)
    loss_upper = up_num / (up_cnt + 1e-8)
    epe_hard = epe_num / float(n_half)      # true element count (incl. tail)
    sr_loss = alpha * (loss_lower + loss_upper) + (1.0 - alpha) * epe_hard
    return disp_loss * disp_emphasis + sr_loss


def _reference(pred_disp, gt_disp, lower_offset_map, upper_offset_map, disp3,
               *, alpha=0.9, disp_emphasis=3.0):
    # pure-JAX mirror of the PyTorch forward (same branches as the kernel)
    scale = gt_disp.shape[-1] // disp3.shape[-1]
    mask = (gt_disp < 192.0) & (gt_disp > 0.0)
    d = pred_disp - gt_disp
    ad = jnp.abs(d)
    sl1 = jnp.where(ad < 1.0, 0.5 * d * d, ad - 0.5)
    disp_loss = jnp.sum(sl1 * mask) / jnp.sum(mask)

    pred = disp3
    gt = disp3 / scale                      # identity bilinear resize then /scale
    lower_th = pred - lower_offset_map
    upper_th = pred + upper_offset_map
    ml = (lower_th - gt > 0).astype(jnp.float32)
    mu = (gt - upper_th > 0).astype(jnp.float32)
    loss_lower = jnp.sum(jnp.abs((lower_th - gt) * ml)) / (jnp.sum(ml) + 1e-8)
    loss_upper = jnp.sum(jnp.abs((upper_th - gt) * mu)) / (jnp.sum(mu) + 1e-8)
    epe = jnp.mean(jnp.abs(upper_th - lower_th))
    sr = alpha * (loss_lower + loss_upper) + (1.0 - alpha) * epe
    return disp_loss * disp_emphasis + sr


if __name__ == "__main__":
    key = jax.random.PRNGKey(0)
    k1, k2, k3, k4, k5 = jax.random.split(key, 5)

    N, C, H, W = 2, 1, 60, 96          # full-res disparity (NCHW)
    H3, W3 = 30, 48                    # disp3 at 1/2 resolution -> scale = 2

    pred_disp = jax.random.uniform(k1, (N, C, H, W), jnp.float32, 1.0, 100.0)
    gt_disp = jax.random.uniform(k2, (N, C, H, W), jnp.float32, 1.0, 100.0)
    disp3 = jax.random.uniform(k3, (N, C, H3, W3), jnp.float32, 1.0, 100.0)
    lower_offset_map = jax.random.uniform(k4, (N, C, H3, W3), jnp.float32, 0.0, 3.0)
    upper_offset_map = jax.random.uniform(k5, (N, C, H3, W3), jnp.float32, 0.0, 3.0)

    ref = _reference(pred_disp, gt_disp, lower_offset_map, upper_offset_map, disp3)

    # Multi-block path with small blocks (forces ragged last blocks + masking).
    out_tiled = total_loss(pred_disp, gt_disp, lower_offset_map, upper_offset_map,
                           disp3, full_block_rows=32)
    out_tiled = jax.block_until_ready(out_tiled)
    assert jnp.allclose(out_tiled, ref, rtol=1e-4, atol=1e-4), (out_tiled, ref)

    # Default (production) block sizes.
    out_default = total_loss(pred_disp, gt_disp, lower_offset_map, upper_offset_map, disp3)
    out_default = jax.block_until_ready(out_default)
    assert jnp.allclose(out_default, ref, rtol=1e-4, atol=1e-4), (out_default, ref)

    # Shapes where neither stream is 128-aligned: exercises the plain-JAX tail
    # path and the clamped half-res index map with fully-masked grid steps.
    H2, W2, H3b, W3b = 37, 50, 19, 25
    pred_b = jax.random.uniform(k1, (N, C, H2, W2), jnp.float32, 1.0, 100.0)
    gt_b = jax.random.uniform(k2, (N, C, H2, W2), jnp.float32, 1.0, 100.0)
    disp3_b = jax.random.uniform(k3, (N, C, H3b, W3b), jnp.float32, 1.0, 100.0)
    lo_b = jax.random.uniform(k4, (N, C, H3b, W3b), jnp.float32, 0.0, 3.0)
    up_b = jax.random.uniform(k5, (N, C, H3b, W3b), jnp.float32, 0.0, 3.0)
    ref_b = _reference(pred_b, gt_b, lo_b, up_b, disp3_b)
    out_b = jax.block_until_ready(total_loss(pred_b, gt_b, lo_b, up_b, disp3_b))
    assert jnp.allclose(out_b, ref_b, rtol=1e-4, atol=1e-4), (out_b, ref_b)

    print("KERNEL_OK")
</pallas_src>

<mosaic_0001>
module attributes {stable_mosaic.version = 11 : i64} {
  func.func @_total_loss_tile_kernel(%arg0: i32, %arg1: memref<32x128xf32, #tpu.memory_space<vmem>>, %arg2: memref<32x128xf32, #tpu.memory_space<vmem>>, %arg3: memref<8x128xf32, #tpu.memory_space<vmem>>, %arg4: memref<8x128xf32, #tpu.memory_space<vmem>>, %arg5: memref<8x128xf32, #tpu.memory_space<vmem>>, %arg6: memref<8x128xf32, #tpu.memory_space<vmem>>) attributes {dimension_semantics = [#tpu.dimension_semantics<parallel>], iteration_bounds = array<i64: 3>, scalar_prefetch = 0 : i64, scratch_operands = 0 : i64, tpu.core_type = #tpu.core_type<tc>, window_params = [{transform_indices = @transform_0, window_bounds = array<i64: 32, 128>}, {transform_indices = @transform_1, window_bounds = array<i64: 32, 128>}, {transform_indices = @transform_2, window_bounds = array<i64: 8, 128>}, {transform_indices = @transform_3, window_bounds = array<i64: 8, 128>}, {transform_indices = @transform_4, window_bounds = array<i64: 8, 128>}, {transform_indices = @transform_5, window_bounds = array<i64: 8, 128>}]} {
    %cst = arith.constant 0.000000e+00 : f32
    %0 = vector.broadcast %cst : f32 to vector<1x128xf32>
    %c0_i32 = arith.constant 0 : i32
    %c32_i32 = arith.constant 32 : i32
    %1 = arith.muli %c0_i32, %c32_i32 : i32
    %2 = tpu.assume_multiple %1, 32 : i32
    %3 = arith.index_cast %2 : i32 to index
    %c0 = arith.constant 0 : index
    %4 = vector.load %arg1[%3, %c0] : memref<32x128xf32, #tpu.memory_space<vmem>>, vector<32x128xf32>
    %5 = arith.index_cast %2 : i32 to index
    %c0_0 = arith.constant 0 : index
    %6 = vector.load %arg2[%5, %c0_0] : memref<32x128xf32, #tpu.memory_space<vmem>>, vector<32x128xf32>
    %cst_1 = arith.constant 1.920000e+02 : f32
    %7 = vector.broadcast %cst_1 : f32 to vector<32x128xf32>
    %8 = arith.cmpf olt, %6, %7 : vector<32x128xf32>
    %cst_2 = arith.constant 0.000000e+00 : f32
    %9 = vector.broadcast %cst_2 : f32 to vector<32x128xf32>
    %10 = arith.cmpf ogt, %6, %9 : vector<32x128xf32>
    %11 = arith.andi %8, %10 : vector<32x128xi1>
    %12 = tpu.iota {dimensions = array<i32: 0>} : vector<32x128xi32>
    %c32_i32_3 = arith.constant 32 : i32
    %13 = arith.muli %arg0, %c32_i32_3 : i32
    %14 = arith.addi %13, %2 : i32
    %15 = vector.broadcast %14 : i32 to vector<32x128xi32>
    %16 = arith.addi %12, %15 : vector<32x128xi32>
    %c90_i32 = arith.constant 90 : i32
    %17 = vector.broadcast %c90_i32 : i32 to vector<32x128xi32>
    %18 = arith.cmpi slt, %16, %17 : vector<32x128xi32>
    %19 = arith.andi %11, %18 : vector<32x128xi1>
    %20 = arith.subf %4, %6 : vector<32x128xf32>
    %21 = math.absf %20 : vector<32x128xf32>
    %cst_4 = arith.constant 1.000000e+00 : f32
    %22 = vector.broadcast %cst_4 : f32 to vector<32x128xf32>
    %23 = arith.cmpf olt, %21, %22 : vector<32x128xf32>
    %cst_5 = arith.constant 5.000000e-01 : f32
    %24 = vector.broadcast %cst_5 : f32 to vector<32x128xf32>
    %25 = arith.mulf %24, %20 : vector<32x128xf32>
    %26 = arith.mulf %25, %20 : vector<32x128xf32>
    %cst_6 = arith.constant 5.000000e-01 : f32
    %27 = vector.broadcast %cst_6 : f32 to vector<32x128xf32>
    %28 = arith.subf %21, %27 : vector<32x128xf32>
    %29 = arith.select %23, %26, %28 : vector<32x128xi1>, vector<32x128xf32>
    %cst_7 = arith.constant 0.000000e+00 : f32
    %30 = vector.broadcast %cst_7 : f32 to vector<32x128xf32>
    %31 = arith.select %19, %29, %30 : vector<32x128xi1>, vector<32x128xf32>
    %cst_8 = arith.constant dense<0.000000e+00> : vector<128xf32>
    %32 = vector.multi_reduction <add>, %31, %cst_8 [0] : vector<32x128xf32> to vector<128xf32>
    %33 = vector.shape_cast %32 : vector<128xf32> to vector<1x128xf32>
    %34 = arith.addf %0, %33 : vector<1x128xf32>
    %35 = arith.extui %19 : vector<32x128xi1> to vector<32x128xi32>
    %36 = arith.sitofp %35 : vector<32x128xi32> to vector<32x128xf32>
    %cst_9 = arith.constant dense<0.000000e+00> : vector<128xf32>
    %37 = vector.multi_reduction <add>, %36, %cst_9 [0] : vector<32x128xf32> to vector<128xf32>
    %38 = vector.shape_cast %37 : vector<128xf32> to vector<1x128xf32>
    %39 = arith.addf %0, %38 : vector<1x128xf32>
    %c1_i32 = arith.constant 1 : i32
    %c0_i32_10 = arith.constant 0 : i32
    %c8_i32 = arith.constant 8 : i32
    %40 = arith.muli %c0_i32_10, %c8_i32 : i32
    %41 = tpu.assume_multiple %40, 8 : i32
    %42 = arith.index_cast %41 : i32 to index
    %c0_11 = arith.constant 0 : index
    %43 = vector.load %arg3[%42, %c0_11] : memref<8x128xf32, #tpu.memory_space<vmem>>, vector<8x128xf32>
    %44 = arith.index_cast %41 : i32 to index
    %c0_12 = arith.constant 0 : index
    %45 = vector.load %arg4[%44, %c0_12] : memref<8x128xf32, #tpu.memory_space<vmem>>, vector<8x128xf32>
    %46 = arith.index_cast %41 : i32 to index
    %c0_13 = arith.constant 0 : index
    %47 = vector.load %arg5[%46, %c0_13] : memref<8x128xf32, #tpu.memory_space<vmem>>, vector<8x128xf32>
    %48 = tpu.iota {dimensions = array<i32: 0>} : vector<8x128xi32>
    %c8_i32_14 = arith.constant 8 : i32
    %49 = arith.muli %arg0, %c8_i32_14 : i32
    %50 = arith.addi %49, %41 : i32
    %51 = vector.broadcast %50 : i32 to vector<8x128xi32>
    %52 = arith.addi %48, %51 : vector<8x128xi32>
    %c22_i32 = arith.constant 22 : i32
    %53 = vector.broadcast %c22_i32 : i32 to vector<8x128xi32>
    %54 = arith.cmpi slt, %52, %53 : vector<8x128xi32>
    %cst_15 = arith.constant 0.000000e+00 : f32
    %55 = vector.broadcast %cst_15 : f32 to vector<8x128xf32>
    %56 = arith.select %54, %43, %55 : vector<8x128xi1>, vector<8x128xf32>
    %cst_16 = arith.constant 0.000000e+00 : f32
    %57 = vector.broadcast %cst_16 : f32 to vector<8x128xf32>
    %58 = arith.select %54, %45, %57 : vector<8x128xi1>, vector<8x128xf32>
    %cst_17 = arith.constant 0.000000e+00 : f32
    %59 = vector.broadcast %cst_17 : f32 to vector<8x128xf32>
    %60 = arith.select %54, %47, %59 : vector<8x128xi1>, vector<8x128xf32>
    %cst_18 = arith.constant 5.000000e-01 : f32
    %61 = vector.broadcast %cst_18 : f32 to vector<8x128xf32>
    %62 = arith.mulf %56, %61 : vector<8x128xf32>
    %63 = arith.subf %62, %58 : vector<8x128xf32>
    %cst_19 = arith.constant 0.000000e+00 : f32
    %64 = vector.broadcast %cst_19 : f32 to vector<8x128xf32>
    %65 = arith.maximumf %63, %64 : vector<8x128xf32>
    %cst_20 = arith.constant 0.000000e+00 : f32
    %66 = vector.broadcast %cst_20 : f32 to vector<8x128xf32>
    %67 = arith.subf %66, %62 : vector<8x128xf32>
    %68 = arith.subf %67, %60 : vector<8x128xf32>
    %cst_21 = arith.constant 0.000000e+00 : f32
    %69 = vector.broadcast %cst_21 : f32 to vector<8x128xf32>
    %70 = arith.maximumf %68, %69 : vector<8x128xf32>
    %cst_22 = arith.constant dense<0.000000e+00> : vector<128xf32>
    %71 = vector.multi_reduction <add>, %65, %cst_22 [0] : vector<8x128xf32> to vector<128xf32>
    %72 = vector.shape_cast %71 : vector<128xf32> to vector<1x128xf32>
    %73 = arith.addf %0, %72 : vector<1x128xf32>
    %cst_23 = arith.constant 0.000000e+00 : f32
    %74 = vector.broadcast %cst_23 : f32 to vector<8x128xf32>
    %75 = arith.cmpf ogt, %65, %74 : vector<8x128xf32>
    %76 = arith.extui %75 : vector<8x128xi1> to vector<8x128xi32>
    %77 = arith.sitofp %76 : vector<8x128xi32> to vector<8x128xf32>
    %cst_24 = arith.constant dense<0.000000e+00> : vector<128xf32>
    %78 = vector.multi_reduction <add>, %77, %cst_24 [0] : vector<8x128xf32> to vector<128xf32>
    %79 = vector.shape_cast %78 : vector<128xf32> to vector<1x128xf32>
    %80 = arith.addf %0, %79 : vector<1x128xf32>
    %cst_25 = arith.constant dense<0.000000e+00> : vector<128xf32>
    %81 = vector.multi_reduction <add>, %70, %cst_25 [0] : vector<8x128xf32> to vector<128xf32>
    %82 = vector.shape_cast %81 : vector<128xf32> to vector<1x128xf32>
    %83 = arith.addf %0, %82 : vector<1x128xf32>
    %cst_26 = arith.constant 0.000000e+00 : f32
    %84 = vector.broadcast %cst_26 : f32 to vector<8x128xf32>
    %85 = arith.cmpf ogt, %70, %84 : vector<8x128xf32>
    %86 = arith.extui %85 : vector<8x128xi1> to vector<8x128xi32>
    %87 = arith.sitofp %86 : vector<8x128xi32> to vector<8x128xf32>
    %cst_27 = arith.constant dense<0.000000e+00> : vector<128xf32>
    %88 = vector.multi_reduction <add>, %87, %cst_27 [0] : vector<8x128xf32> to vector<128xf32>
    %89 = vector.shape_cast %88 : vector<128xf32> to vector<1x128xf32>
    %90 = arith.addf %0, %89 : vector<1x128xf32>
    %91 = arith.addf %58, %60 : vector<8x128xf32>
    %92 = math.absf %91 : vector<8x128xf32>
    %cst_28 = arith.constant dense<0.000000e+00> : vector<128xf32>
    %93 = vector.multi_reduction <add>, %92, %cst_28 [0] : vector<8x128xf32> to vector<128xf32>
    %94 = vector.shape_cast %93 : vector<128xf32> to vector<1x128xf32>
    %95 = arith.addf %0, %94 : vector<1x128xf32>
    %c1_i32_29 = arith.constant 1 : i32
    %c0_30 = arith.constant 0 : index
    %c0_31 = arith.constant 0 : index
    %96 = vector.load %arg6[%c0_30, %c0_31] : memref<8x128xf32, #tpu.memory_space<vmem>>, vector<1x128xf32>
    tpu.vector_store %arg6[%c0_30, %c0_31], %34 {strides = array<i32>} : memref<8x128xf32, #tpu.memory_space<vmem>>, vector<1x128xf32>,
    %c1 = arith.constant 1 : index
    %c0_32 = arith.constant 0 : index
    %97 = vector.load %arg6[%c1, %c0_32] : memref<8x128xf32, #tpu.memory_space<vmem>>, vector<1x128xf32>
    tpu.vector_store %arg6[%c1, %c0_32], %39 {strides = array<i32>} : memref<8x128xf32, #tpu.memory_space<vmem>>, vector<1x128xf32>,
    %c2 = arith.constant 2 : index
    %c0_33 = arith.constant 0 : index
    %98 = vector.load %arg6[%c2, %c0_33] : memref<8x128xf32, #tpu.memory_space<vmem>>, vector<1x128xf32>
    tpu.vector_store %arg6[%c2, %c0_33], %73 {strides = array<i32>} : memref<8x128xf32, #tpu.memory_space<vmem>>, vector<1x128xf32>,
    %c3 = arith.constant 3 : index
    %c0_34 = arith.constant 0 : index
    %99 = vector.load %arg6[%c3, %c0_34] : memref<8x128xf32, #tpu.memory_space<vmem>>, vector<1x128xf32>
    tpu.vector_store %arg6[%c3, %c0_34], %80 {strides = array<i32>} : memref<8x128xf32, #tpu.memory_space<vmem>>, vector<1x128xf32>,
    %c4 = arith.constant 4 : index
    %c0_35 = arith.constant 0 : index
    %100 = vector.load %arg6[%c4, %c0_35] : memref<8x128xf32, #tpu.memory_space<vmem>>, vector<1x128xf32>
    tpu.vector_store %arg6[%c4, %c0_35], %83 {strides = array<i32>} : memref<8x128xf32, #tpu.memory_space<vmem>>, vector<1x128xf32>,
    %c5 = arith.constant 5 : index
    %c0_36 = arith.constant 0 : index
    %101 = vector.load %arg6[%c5, %c0_36] : memref<8x128xf32, #tpu.memory_space<vmem>>, vector<1x128xf32>
    tpu.vector_store %arg6[%c5, %c0_36], %90 {strides = array<i32>} : memref<8x128xf32, #tpu.memory_space<vmem>>, vector<1x128xf32>,
    %c6 = arith.constant 6 : index
    %c0_37 = arith.constant 0 : index
    %102 = vector.load %arg6[%c6, %c0_37] : memref<8x128xf32, #tpu.memory_space<vmem>>, vector<1x128xf32>
    tpu.vector_store %arg6[%c6, %c0_37], %95 {strides = array<i32>} : memref<8x128xf32, #tpu.memory_space<vmem>>, vector<1x128xf32>,
    return
  }
  func.func @transform_0(%arg0: i32) -> (i32, i32) {
    %c0_i32 = arith.constant 0 : i32
    %c0_i32_0 = arith.constant 0 : i32
    return %arg0, %c0_i32 : i32, i32
  }
  func.func @transform_1(%arg0: i32) -> (i32, i32) {
    %c0_i32 = arith.constant 0 : i32
    %c0_i32_0 = arith.constant 0 : i32
    return %arg0, %c0_i32 : i32, i32
  }
  func.func @transform_2(%arg0: i32) -> (i32, i32) {
    %c0_i32 = arith.constant 0 : i32
    %c0_i32_0 = arith.constant 0 : i32
    return %arg0, %c0_i32 : i32, i32
  }
  func.func @transform_3(%arg0: i32) -> (i32, i32) {
    %c0_i32 = arith.constant 0 : i32
    %c0_i32_0 = arith.constant 0 : i32
    return %arg0, %c0_i32 : i32, i32
  }
  func.func @transform_4(%arg0: i32) -> (i32, i32) {
    %c0_i32 = arith.constant 0 : i32
    %c0_i32_0 = arith.constant 0 : i32
    return %arg0, %c0_i32 : i32, i32
  }
  func.func @transform_5(%arg0: i32) -> (i32, i32) {
    %c0_i32 = arith.constant 0 : i32
    %c0_i32_0 = arith.constant 0 : i32
    return %arg0, %c0_i32 : i32, i32
  }
}

</mosaic_0001>

<llo_original>
// kernel: tpu_custom_call.1
$region0: #{tpu_custom_call.1}
  #allocation0 [shape = 'u32[]', space=smem, size = 0x4, offset = 0x4, fixed_abs, tag = 'smem constant byte address 0x4 - core index']
  #allocation1 [shape = 'u32[144,128]{1,0:T(1,128)}', space=vmem, size = 0x12000, scoped, tag = 'internal scratch']
  %s0 = inlined_call_operand.hbm [shape: f32[90,128], index: 0, kind: input, shape index: {}]
  %s1 = inlined_call_operand.hbm [shape: f32[90,128], index: 1, kind: input, shape index: {}]
  %s2 = inlined_call_operand.hbm [shape: f32[22,128], index: 2, kind: input, shape index: {}]
  %s3 = inlined_call_operand.hbm [shape: f32[22,128], index: 3, kind: input, shape index: {}]
  %s4 = inlined_call_operand.hbm [shape: f32[22,128], index: 4, kind: input, shape index: {}]
  %s5 = inlined_call_operand.hbm [shape: f32[24,128], index: 5, kind: output, shape index: {}]
  %s6 = sld [smem:[#allocation0]]
  $region73: #{tpu_custom_call.1} parent=0
    _
  %s8 = ssub.s32 1, %s6
  %s9 = scalar_select 0, %s8, %s6
  $region1: #{tpu_custom_call.1} parent=0
    #allocation2 [shape = 'u8[32768]{0}', space=vmem, size = 0x8000, scoped, tag = 'input window, operand 0']
    #allocation3 [shape = 's32[2]{0}', space=sflag, size = 0x8, scoped, tag = 'scoped memory for tpu_custom_call.1']
    #allocation4 [shape = 's32[2]{0}', space=sflag, size = 0x8, scoped, tag = 'scoped memory for tpu_custom_call.1']
    #allocation5 [shape = 'u8[32768]{0}', space=vmem, size = 0x8000, scoped, tag = 'input window, operand 1']
    #allocation6 [shape = 's32[2]{0}', space=sflag, size = 0x8, scoped, tag = 'scoped memory for tpu_custom_call.1']
    #allocation7 [shape = 'u8[8192]{0}', space=vmem, size = 0x2000, scoped, tag = 'input window, operand 2']
    #allocation8 [shape = 'u8[8192]{0}', space=vmem, size = 0x2000, scoped, tag = 'input window, operand 3']
    #allocation9 [shape = 's32[2]{0}', space=sflag, size = 0x8, scoped, tag = 'scoped memory for tpu_custom_call.1']
    #allocation10 [shape = 'u8[8192]{0}', space=vmem, size = 0x2000, scoped, tag = 'input window, operand 4']
    #allocation11 [shape = 'u8[8192]{0}', space=vmem, size = 0x2000, scoped, tag = 'output window, operand 0']
    %10 = vsyncpa [#allocation3], 0
    %s11 = scalar_lea.sflag [#allocation3], 1
    %12 = vsyncpa %s11, 0
    %13 = vsyncpa [#allocation6], 0
    %s14 = scalar_lea.sflag [#allocation6], 1
    %15 = vsyncpa %s14, 0
    %16 = vsyncpa [#allocation9], 0
    %s17 = scalar_lea.sflag [#allocation9], 1
    %18 = vsyncpa %s17, 0
    %19 = vsyncpa [#allocation4], 0
    %s20 = scalar_lea.sflag [#allocation4], 1
    %21 = vsyncpa %s20, 0
    loop: start=0, step=1, limit=5
    $region2: #{tpu_custom_call.1} parent=1 // loop_pre_header
      _
    $region3: #{tpu_custom_call.1} parent=1 // loop_header
      %s23 = sphi 0, %s27
      %p24 = scmp.ge.s32.totalorder %s23, 5
      %s33 = sphi 0, %s35
      %s36 = sphi 0, %s33
      %s37 = sphi 0, %s36
      %s53 = sphi 0, %s37
      %s59 = sphi 0, %s61
      %s62 = sphi 0, %s59
      %s63 = sphi 0, %s62
      %s79 = sphi 0, %s63
      %s85 = sphi 0, %s87
      %s88 = sphi 0, %s85
      %s89 = sphi 0, %s88
      %s105 = sphi 0, %s89
      %s111 = sphi 0, %s113
      %s114 = sphi 0, %s111
      %s115 = sphi 0, %s114
      %s131 = sphi 0, %s115
      %s137 = sphi 0, %s139
      %s140 = sphi 0, %s137
      %s141 = sphi 0, %s140
      %s157 = sphi 0, %s141
      %s163 = sphi 0, %s165
      %s166 = sphi 0, %s163
      %s167 = sphi 0, %s166
      %s183 = sphi 0, %s167
    $region4: #{tpu_custom_call.1} parent=1 // loop_header_branch
      %26 = sbr.rel (%p24) target = $region8
    $region5: #{tpu_custom_call.1} parent=1 // loop_body
      %s28 = ssub.s32 %s23, 1
      %s29 = ssub.s32 %s23, 2
      %s30 = sadd.s32 %s23, 1
      %s31 = ssub.s32 %s23, %s30
      %p32 = scmp.eq.s32.totalorder %s31, 0
      %s34 = sadd.s32 %s33, 1
      %s35 = scalar_select %p32, %s33, %s34
      %p38 = pneg %p32
      %p39 = scmp.eq.s32.totalorder %s23, 2
      %p40 = por %p38, %p39
      %p41 = scmp.ne.s32.totalorder %s33, %s36
      %p42 = scmp.eq.s32.totalorder %s23, 0
      %p43 = por %p41, %p42
      %p44 = scmp.ne.s32.totalorder %s33, %s36
      %p45 = scmp.eq.s32.totalorder %s28, 2
      %p46 = por %p44, %p45
      %p47 = scmp.ne.s32.totalorder %s36, %s37
      %p48 = scmp.eq.s32.totalorder %s28, 0
      %p49 = por %p47, %p48
      %p50 = scmp.ne.s32.totalorder %s36, %s37
      %p51 = scmp.eq.s32.totalorder %s29, 2
      %p52 = por %p50, %p51
      %p54 = scmp.ne.s32.totalorder %s37, %s53
      %p55 = scmp.eq.s32.totalorder %s29, 0
      %p56 = por %p54, %p55
      %s57 = ssub.s32 %s23, %s30
      %p58 = scmp.eq.s32.totalorder %s57, 0
      %s60 = sadd.s32 %s59, 1
      %s61 = scalar_select %p58, %s59, %s60
      %p64 = pneg %p58
      %p65 = scmp.eq.s32.totalorder %s23, 2
      %p66 = por %p64, %p65
      %p67 = scmp.ne.s32.totalorder %s59, %s62
      %p68 = scmp.eq.s32.totalorder %s23, 0
      %p69 = por %p67, %p68
      %p70 = scmp.ne.s32.totalorder %s59, %s62
      %p71 = scmp.eq.s32.totalorder %s28, 2
      %p72 = por %p70, %p71
      %p73 = scmp.ne.s32.totalorder %s62, %s63
      %p74 = scmp.eq.s32.totalorder %s28, 0
      %p75 = por %p73, %p74
      %p76 = scmp.ne.s32.totalorder %s62, %s63
      %p77 = scmp.eq.s32.totalorder %s29, 2
      %p78 = por %p76, %p77
      %p80 = scmp.ne.s32.totalorder %s63, %s79
      %p81 = scmp.eq.s32.totalorder %s29, 0
      %p82 = por %p80, %p81
      %s83 = ssub.s32 %s23, %s30
      %p84 = scmp.eq.s32.totalorder %s83, 0
      %s86 = sadd.s32 %s85, 1
      %s87 = scalar_select %p84, %s85, %s86
      %p90 = pneg %p84
      %p91 = scmp.eq.s32.totalorder %s23, 2
      %p92 = por %p90, %p91
      %p93 = scmp.ne.s32.totalorder %s85, %s88
      %p94 = scmp.eq.s32.totalorder %s23, 0
      %p95 = por %p93, %p94
      %p96 = scmp.ne.s32.totalorder %s85, %s88
      %p97 = scmp.eq.s32.totalorder %s28, 2
      %p98 = por %p96, %p97
      %p99 = scmp.ne.s32.totalorder %s88, %s89
      %p100 = scmp.eq.s32.totalorder %s28, 0
      %p101 = por %p99, %p100
      %p102 = scmp.ne.s32.totalorder %s88, %s89
      %p103 = scmp.eq.s32.totalorder %s29, 2
      %p104 = por %p102, %p103
      %p106 = scmp.ne.s32.totalorder %s89, %s105
      %p107 = scmp.eq.s32.totalorder %s29, 0
      %p108 = por %p106, %p107
      %s109 = ssub.s32 %s23, %s30
      %p110 = scmp.eq.s32.totalorder %s109, 0
      %s112 = sadd.s32 %s111, 1
      %s113 = scalar_select %p110, %s111, %s112
      %p116 = pneg %p110
      %p117 = scmp.eq.s32.totalorder %s23, 2
      %p118 = por %p116, %p117
      %p119 = scmp.ne.s32.totalorder %s111, %s114
      %p120 = scmp.eq.s32.totalorder %s23, 0
      %p121 = por %p119, %p120
      %p122 = scmp.ne.s32.totalorder %s111, %s114
      %p123 = scmp.eq.s32.totalorder %s28, 2
      %p124 = por %p122, %p123
      %p125 = scmp.ne.s32.totalorder %s114, %s115
      %p126 = scmp.eq.s32.totalorder %s28, 0
      %p127 = por %p125, %p126
      %p128 = scmp.ne.s32.totalorder %s114, %s115
      %p129 = scmp.eq.s32.totalorder %s29, 2
      %p130 = por %p128, %p129
      %p132 = scmp.ne.s32.totalorder %s115, %s131
      %p133 = scmp.eq.s32.totalorder %s29, 0
      %p134 = por %p132, %p133
      %s135 = ssub.s32 %s23, %s30
      %p136 = scmp.eq.s32.totalorder %s135, 0
      %s138 = sadd.s32 %s137, 1
      %s139 = scalar_select %p136, %s137, %s138
      %p142 = pneg %p136
      %p143 = scmp.eq.s32.totalorder %s23, 2
      %p144 = por %p142, %p143
      %p145 = scmp.ne.s32.totalorder %s137, %s140
      %p146 = scmp.eq.s32.totalorder %s23, 0
      %p147 = por %p145, %p146
      %p148 = scmp.ne.s32.totalorder %s137, %s140
      %p149 = scmp.eq.s32.totalorder %s28, 2
      %p150 = por %p148, %p149
      %p151 = scmp.ne.s32.totalorder %s140, %s141
      %p152 = scmp.eq.s32.totalorder %s28, 0
      %p153 = por %p151, %p152
      %p154 = scmp.ne.s32.totalorder %s140, %s141
      %p155 = scmp.eq.s32.totalorder %s29, 2
      %p156 = por %p154, %p155
      %p158 = scmp.ne.s32.totalorder %s141, %s157
      %p159 = scmp.eq.s32.totalorder %s29, 0
      %p160 = por %p158, %p159
      %s161 = ssub.s32 %s23, %s30
      %p162 = scmp.eq.s32.totalorder %s161, 0
      %s164 = sadd.s32 %s163, 1
      %s165 = scalar_select %p162, %s163, %s164
      %p168 = pneg %p162
      %p169 = scmp.eq.s32.totalorder %s23, 2
      %p170 = por %p168, %p169
      %p171 = scmp.ne.s32.totalorder %s163, %s166
      %p172 = scmp.eq.s32.totalorder %s23, 0
      %p173 = por %p171, %p172
      %p174 = scmp.ne.s32.totalorder %s163, %s166
      %p175 = scmp.eq.s32.totalorder %s28, 2
      %p176 = por %p174, %p175
      %p177 = scmp.ne.s32.totalorder %s166, %s167
      %p178 = scmp.eq.s32.totalorder %s28, 0
      %p179 = por %p177, %p178
      %p180 = scmp.ne.s32.totalorder %s166, %s167
      %p181 = scmp.eq.s32.totalorder %s29, 2
      %p182 = por %p180, %p181
      %p184 = scmp.ne.s32.totalorder %s167, %s183
      %p185 = scmp.eq.s32.totalorder %s29, 0
      %p186 = por %p184, %p185
      %p187 = scmp.le.s32.totalorder 1, %s23
      %p188 = scmp.lt.s32.totalorder %s23, 4
      %p189 = pnand %p187, %p188
      %p190 = pneg %p189
      // Predicated region
      $region9: #{tpu_custom_call.1} parent=5 // pred_check
        _
      $region10: #{tpu_custom_call.1} parent=5 // pred_check_branch
        %192 = sbr.rel (%p189) target = $region12
      $region11: #{tpu_custom_call.1} parent=5 // pred_region
        %s193 = ssub.s32 %s23, 1
      $region12: #{tpu_custom_call.1} parent=5 // pred_fallthru
        _
      %p194 = scmp.lt.s32.totalorder %s23, 3
      // Predicated region
      $region13: #{tpu_custom_call.1} parent=5 // pred_check
        %p195 = pneg %p194
      $region14: #{tpu_custom_call.1} parent=5 // pred_check_branch
        %197 = sbr.rel (%p195) target = $region16
      $region15: #{tpu_custom_call.1} parent=5 // pred_region
        // Predicated region
        $region17: #{tpu_custom_call.1} parent=15 // pred_check
          %p198 = pneg %p43
        $region18: #{tpu_custom_call.1} parent=15 // pred_check_branch
          %200 = sbr.rel (%p198) target = $region20
        $region19: #{tpu_custom_call.1} parent=15 // pred_region
          %s201 = sand.u32 %s33, 1
          %s202 = scalar_lea.sflag [#allocation3], %s201
          %s203 = sand.u32 %s33, 1
          %s204 = smul.addr %s203, 32
          %s205 = scalar_lea.vmem [#allocation2], %s204
          %s206 = smul.u32 4, %s23
          %s208 = ssub.s32 512, 512
          %209 = vsyncadd %s202, %s208
          %s210 = smul.addr %s206, 128
          %s211 = scalar_lea.hbm %s0, %s210
          %s212 = sshll.u32 %s205, 4
          %s213 = int_to_ptr.vmem [resolvable:$true] %s212
          %218 = dma.hbm_to_vmem [thread:$0]  %s211, 512, %s213, %s202, 128, 128, 8
        $region20: #{tpu_custom_call.1} parent=15 // pred_fallthru
          _
        // Predicated region
        $region21: #{tpu_custom_call.1} parent=15 // pred_check
          %p219 = pneg %p69
        $region22: #{tpu_custom_call.1} parent=15 // pred_check_branch
          %221 = sbr.rel (%p219) target = $region24
        $region23: #{tpu_custom_call.1} parent=15 // pred_region
          %s222 = sand.u32 %s23, 1
          %s223 = scalar_lea.sflag [#allocation6], %s222
          %s224 = sand.u32 %s59, 1
          %s225 = smul.addr %s224, 32
          %s226 = scalar_lea.vmem [#allocation5], %s225
          %s227 = smul.u32 4, %s23
          %s229 = ssub.s32 512, 512
          %230 = vsyncadd %s223, %s229
          %s231 = smul.addr %s227, 128
          %s232 = scalar_lea.hbm %s1, %s231
          %s233 = sshll.u32 %s226, 4
          %s234 = int_to_ptr.vmem [resolvable:$true] %s233
          %239 = dma.hbm_to_vmem [thread:$0]  %s232, 512, %s234, %s223, 128, 128, 8
        $region24: #{tpu_custom_call.1} parent=15 // pred_fallthru
          _
        // Predicated region
        $region25: #{tpu_custom_call.1} parent=15 // pred_check
          %p240 = pneg %p95
        $region26: #{tpu_custom_call.1} parent=15 // pred_check_branch
          %242 = sbr.rel (%p240) target = $region28
        $region27: #{tpu_custom_call.1} parent=15 // pred_region
          %s243 = sand.u32 %s23, 1
          %s244 = scalar_lea.sflag [#allocation6], %s243
          %s245 = sand.u32 %s85, 1
          %s246 = smul.addr %s245, 8
          %s247 = scalar_lea.vmem [#allocation7], %s246
          %s249 = ssub.s32 128, 128
          %250 = vsyncadd %s244, %s249
          %s251 = smul.addr %s23, 128
          %s252 = scalar_lea.hbm %s2, %s251
          %s254 = sshll.u32 %s247, 4
          %s255 = int_to_ptr.vmem [resolvable:$true] %s254
          %257 = dma.hbm_to_vmem [thread:$0]  %s252, 128, %s255, %s244
        $region28: #{tpu_custom_call.1} parent=15 // pred_fallthru
          _
        // Predicated region
        $region29: #{tpu_custom_call.1} parent=15 // pred_check
          %p258 = pneg %p121
        $region30: #{tpu_custom_call.1} parent=15 // pred_check_branch
          %260 = sbr.rel (%p258) target = $region32
        $region31: #{tpu_custom_call.1} parent=15 // pred_region
          %s261 = sand.u32 %s23, 1
          %s262 = scalar_lea.sflag [#allocation9], %s261
          %s263 = sand.u32 %s111, 1
          %s264 = smul.addr %s263, 8
          %s265 = scalar_lea.vmem [#allocation8], %s264
          %s267 = ssub.s32 128, 128
          %268 = vsyncadd %s262, %s267
          %s269 = smul.addr %s23, 128
          %s270 = scalar_lea.hbm %s3, %s269
          %s272 = sshll.u32 %s265, 4
          %s273 = int_to_ptr.vmem [resolvable:$true] %s272
          %275 = dma.hbm_to_vmem [thread:$0]  %s270, 128, %s273, %s262
        $region32: #{tpu_custom_call.1} parent=15 // pred_fallthru
          _
        // Predicated region
        $region33: #{tpu_custom_call.1} parent=15 // pred_check
          %p276 = pneg %p147
        $region34: #{tpu_custom_call.1} parent=15 // pred_check_branch
          %278 = sbr.rel (%p276) target = $region36
        $region35: #{tpu_custom_call.1} parent=15 // pred_region
          %s279 = sand.u32 %s23, 1
          %s280 = scalar_lea.sflag [#allocation9], %s279
          %s281 = sand.u32 %s137, 1
          %s282 = smul.addr %s281, 8
          %s283 = scalar_lea.vmem [#allocation10], %s282
          %s285 = ssub.s32 128, 128
          %286 = vsyncadd %s280, %s285
          %s287 = smul.addr %s23, 128
          %s288 = scalar_lea.hbm %s4, %s287
          %s290 = sshll.u32 %s283, 4
          %s291 = int_to_ptr.vmem [resolvable:$true] %s290
          %293 = dma.hbm_to_vmem [thread:$0]  %s288, 128, %s291, %s280
        $region36: #{tpu_custom_call.1} parent=15 // pred_fallthru
          _
      $region16: #{tpu_custom_call.1} parent=5 // pred_fallthru
        _
      %p294 = scmp.le.s32.totalorder 1, %s23
      %p295 = scmp.lt.s32.totalorder %s23, 4
      %p296 = pnand %p294, %p295
      %p297 = pneg %p296
      // Predicated region
      $region37: #{tpu_custom_call.1} parent=5 // pred_check
        _
      $region38: #{tpu_custom_call.1} parent=5 // pred_check_branch
        %299 = sbr.rel (%p296) target = $region40
      $region39: #{tpu_custom_call.1} parent=5 // pred_region
        %s300 = ssub.s32 %s23, 1
        %s301 = sand.u32 %s36, 1
        %s302 = scalar_lea.sflag [#allocation3], %s301
        %s303 = sand.u32 %s36, 1
        %s304 = smul.addr %s303, 32
        %s305 = scalar_lea.vmem [#allocation2], %s304
        // Predicated region
        $region41: #{tpu_custom_call.1} parent=39 // pred_check
          %p306 = pneg %p49
        $region42: #{tpu_custom_call.1} parent=39 // pred_check_branch
          %308 = sbr.rel (%p306) target = $region44
        $region43: #{tpu_custom_call.1} parent=39 // pred_region
          %309 = dma.done %s302, 512
        $region44: #{tpu_custom_call.1} parent=39 // pred_fallthru
          _
        %s310 = sand.u32 %s28, 1
        %s311 = scalar_lea.sflag [#allocation6], %s310
        %s312 = sand.u32 %s62, 1
        %s313 = smul.addr %s312, 32
        %s314 = scalar_lea.vmem [#allocation5], %s313
        // Predicated region
        $region45: #{tpu_custom_call.1} parent=39 // pred_check
          %p315 = pneg %p75
        $region46: #{tpu_custom_call.1} parent=39 // pred_check_branch
          %317 = sbr.rel (%p315) target = $region48
        $region47: #{tpu_custom_call.1} parent=39 // pred_region
          %318 = dma.done %s311, 512
        $region48: #{tpu_custom_call.1} parent=39 // pred_fallthru
          _
        %s319 = sand.u32 %s28, 1
        %s320 = scalar_lea.sflag [#allocation6], %s319
        %s321 = sand.u32 %s88, 1
        %s322 = smul.addr %s321, 8
        %s323 = scalar_lea.vmem [#allocation7], %s322
        // Predicated region
        $region49: #{tpu_custom_call.1} parent=39 // pred_check
          %p324 = pneg %p101
        $region50: #{tpu_custom_call.1} parent=39 // pred_check_branch
          %326 = sbr.rel (%p324) target = $region52
        $region51: #{tpu_custom_call.1} parent=39 // pred_region
          %327 = dma.done %s320, 128
        $region52: #{tpu_custom_call.1} parent=39 // pred_fallthru
          _
        %s328 = sand.u32 %s28, 1
        %s329 = scalar_lea.sflag [#allocation9], %s328
        %s330 = sand.u32 %s114, 1
        %s331 = smul.addr %s330, 8
        %s332 = scalar_lea.vmem [#allocation8], %s331
        // Predicated region
        $region53: #{tpu_custom_call.1} parent=39 // pred_check
          %p333 = pneg %p127
        $region54: #{tpu_custom_call.1} parent=39 // pred_check_branch
          %335 = sbr.rel (%p333) target = $region56
        $region55: #{tpu_custom_call.1} parent=39 // pred_region
          %336 = dma.done %s329, 128
        $region56: #{tpu_custom_call.1} parent=39 // pred_fallthru
          _
        %s337 = sand.u32 %s28, 1
        %s338 = scalar_lea.sflag [#allocation9], %s337
        %s339 = sand.u32 %s140, 1
        %s340 = smul.addr %s339, 8
        %s341 = scalar_lea.vmem [#allocation10], %s340
        // Predicated region
        $region57: #{tpu_custom_call.1} parent=39 // pred_check
          %p342 = pneg %p153
        $region58: #{tpu_custom_call.1} parent=39 // pred_check_branch
          %344 = sbr.rel (%p342) target = $region60
        $region59: #{tpu_custom_call.1} parent=39 // pred_region
          %345 = dma.done %s338, 128
        $region60: #{tpu_custom_call.1} parent=39 // pred_fallthru
          _
        %s346 = sand.u32 %s36, 1
        %s347 = scalar_lea.sflag [#allocation3], %s346
        %s348 = sand.u32 %s36, 1
        %s349 = smul.addr %s348, 32
        %s350 = scalar_lea.vmem [#allocation2], %s349
        %p351 = pneg %p49
        %p352 = pneg %p46
        %s353 = sand.u32 %s28, 1
        %s354 = scalar_lea.sflag [#allocation6], %s353
        %s355 = sand.u32 %s62, 1
        %s356 = smul.addr %s355, 32
        %s357 = scalar_lea.vmem [#allocation5], %s356
        %p358 = pneg %p75
        %p359 = pneg %p72
        %s360 = sand.u32 %s28, 1
        %s361 = scalar_lea.sflag [#allocation6], %s360
        %s362 = sand.u32 %s88, 1
        %s363 = smul.addr %s362, 8
        %s364 = scalar_lea.vmem [#allocation7], %s363
        %p365 = pneg %p101
        %p366 = pneg %p98
        %s367 = sand.u32 %s28, 1
        %s368 = scalar_lea.sflag [#allocation9], %s367
        %s369 = sand.u32 %s114, 1
        %s370 = smul.addr %s369, 8
        %s371 = scalar_lea.vmem [#allocation8], %s370
        %p372 = pneg %p127
        %p373 = pneg %p124
        %s374 = sand.u32 %s28, 1
        %s375 = scalar_lea.sflag [#allocation9], %s374
        %s376 = sand.u32 %s140, 1
        %s377 = smul.addr %s376, 8
        %s378 = scalar_lea.vmem [#allocation10], %s377
        %p379 = pneg %p153
        %p380 = pneg %p150
        %p381 = pneg %p179
        %p382 = pneg %p176
        %s383 = sand.u32 %s166, 1
        %s384 = scalar_lea.sflag [#allocation4], %s383
        %s385 = sand.u32 %s166, 1
        %s386 = smul.addr %s385, 8
        %s387 = scalar_lea.vmem [#allocation11], %s386
        %s388 = smul.u32 4, %s28
        %s389 = smul.u32 4, %s28
        %v390 = vld [vmem:[%s305] sm:$0xff]
        %v391 = vld [vmem:[%s305 + $0x8] sm:$0xff]
        %v392 = vld [vmem:[%s305 + $0x10] sm:$0xff]
        %v393 = vld [vmem:[%s305 + $0x18] sm:$0xff]
        %v394 = vld [vmem:[%s314] sm:$0xff]
        %v395 = vld [vmem:[%s314 + $0x8] sm:$0xff]
        %v396 = vld [vmem:[%s314 + $0x10] sm:$0xff]
        %v397 = vld [vmem:[%s314 + $0x18] sm:$0xff]
        %vm398 = vcmp.lt.f32.partialorder %v394, 192.0
        %vm399 = vcmp.lt.f32.partialorder %v395, 192.0
        %vm400 = vcmp.lt.f32.partialorder %v396, 192.0
        %vm401 = vcmp.lt.f32.partialorder %v397, 192.0
        %vm402 = vcmp.gt.f32.partialorder %v394, 0.0
        %vm403 = vcmp.gt.f32.partialorder %v395, 0.0
        %vm404 = vcmp.gt.f32.partialorder %v396, 0.0
        %vm405 = vcmp.gt.f32.partialorder %v397, 0.0
        %vm406 = vmand %vm398, %vm402
        %vm407 = vmand %vm399, %vm403
        %vm408 = vmand %vm400, %vm404
        %vm409 = vmand %vm401, %vm405
        %v410 = vlaneseq
        %v411 = vshrl.u32 %v410, 7
        %v412 = vadd.s32 %v411, 8
        %v413 = vadd.s32 %v411, 16
        %v414 = vadd.s32 %v411, 24
        %s415 = smul.u32 %s28, 32
        %s416 = sadd.s32 %s415, 0
        %v417 = vstv %s416
        %v418 = vadd.s32 %v411, %v417
        %v419 = vadd.s32 %v412, %v417
        %v420 = vadd.s32 %v413, %v417
        %v421 = vadd.s32 %v414, %v417
        %vm422 = vcmp.lt.s32.totalorder %v418, 90
        %vm423 = vcmp.lt.s32.totalorder %v419, 90
        %vm424 = vcmp.lt.s32.totalorder %v420, 90
        %vm425 = vcmp.lt.s32.totalorder %v421, 90
        %vm426 = vmand %vm406, %vm422
        %vm427 = vmand %vm407, %vm423
        %vm428 = vmand %vm408, %vm424
        %vm429 = vmand %vm409, %vm425
        %v430 = vsub.f32 %v390, %v394
        %v431 = vsub.f32 %v391, %v395
        %v432 = vsub.f32 %v392, %v396
        %v433 = vsub.f32 %v393, %v397
        %v434 = vand.u32 2147483647, %v430
        %v435 = vand.u32 2147483647, %v431
        %v436 = vand.u32 2147483647, %v432
        %v437 = vand.u32 2147483647, %v433
        %vm438 = vcmp.lt.f32.partialorder %v434, 1.0
        %vm439 = vcmp.lt.f32.partialorder %v435, 1.0
        %vm440 = vcmp.lt.f32.partialorder %v436, 1.0
        %vm441 = vcmp.lt.f32.partialorder %v437, 1.0
        %v442 = vmul.f32 %v430, 0.5
        %v443 = vmul.f32 %v431, 0.5
        %v444 = vmul.f32 %v432, 0.5
        %v445 = vmul.f32 %v433, 0.5
        %v446 = vmul.f32 %v442, %v430
        %v447 = vmul.f32 %v443, %v431
        %v448 = vmul.f32 %v444, %v432
        %v449 = vmul.f32 %v445, %v433
        %v450 = vsub.f32 %v434, 0.5
        %v451 = vsub.f32 %v435, 0.5
        %v452 = vsub.f32 %v436, 0.5
        %v453 = vsub.f32 %v437, 0.5
        %v454 = vsel %vm438, %v446, %v450
        %v455 = vsel %vm439, %v447, %v451
        %v456 = vsel %vm440, %v448, %v452
        %v457 = vsel %vm441, %v449, %v453
        %v458 = vsel %vm426, %v454, 0.0
        %v459 = vsel %vm427, %v455, 0.0
        %v460 = vsel %vm428, %v456, 0.0
        %v461 = vsel %vm429, %v457, 0.0
        %v462 = vadd.f32 %v458, %v459
        %v463 = vadd.f32 %v462, %v460
        %v464 = vadd.f32 %v463, %v461
        %v465 = vrot.slane %v464, 4
        %v466 = vadd.f32 %v464, %v465
        %v467 = vrot.slane %v466, 2
        %v468 = vadd.f32 %v466, %v467
        %v469 = vrot.slane %v468, 1
        %v470 = vadd.f32 %v468, %v469
        %v471 = vadd.f32 %v470, 0.0
        %v472 = vsel %vm426, 1, 0
        %v473 = vsel %vm427, 1, 0
        %v474 = vsel %vm428, 1, 0
        %v475 = vsel %vm429, 1, 0
        %v476 = vcvt.s32.f32 %v472
        %v477 = vcvt.s32.f32 %v473
        %v478 = vcvt.s32.f32 %v474
        %v479 = vcvt.s32.f32 %v475
        %v480 = vadd.f32 %v476, %v477
        %v481 = vadd.f32 %v480, %v478
        %v482 = vadd.f32 %v481, %v479
        %v483 = vrot.slane %v482, 4
        %v484 = vadd.f32 %v482, %v483
        %v485 = vrot.slane %v484, 2
        %v486 = vadd.f32 %v484, %v485
        %v487 = vrot.slane %v486, 1
        %v488 = vadd.f32 %v486, %v487
        %v489 = vadd.f32 %v488, 0.0
        %v490 = vld [vmem:[%s323] sm:$0xff]
        %v491 = vld [vmem:[%s332] sm:$0xff]
        %v492 = vld [vmem:[%s341] sm:$0xff]
        %s493 = smul.u32 %s28, 8
        %s494 = sadd.s32 %s493, 0
        %v495 = vstv %s494
        %v496 = vadd.s32 %v411, %v495
        %vm497 = vcmp.lt.s32.totalorder %v496, 22
        %v498 = vsel %vm497, %v490, 0.0
        %v499 = vsel %vm497, %v491, 0.0
        %v500 = vsel %vm497, %v492, 0.0
        %v501 = vmul.f32 %v498, 0.5
        %v502 = vsub.f32 %v501, %v499
        %v503 = vmax.f32 %v502, 0.0
        %v504 = vsub.f32 0.0, %v501
        %v505 = vsub.f32 %v504, %v500
        %v506 = vmax.f32 %v505, 0.0
        %v507 = vrot.slane %v503, 4
        %v508 = vadd.f32 %v503, %v507
        %v509 = vrot.slane %v508, 2
        %v510 = vadd.f32 %v508, %v509
        %v511 = vrot.slane %v510, 1
        %v512 = vadd.f32 %v510, %v511
        %v513 = vadd.f32 %v512, 0.0
        %vm514 = vcmp.gt.f32.partialorder %v503, 0.0
        %v515 = vsel %vm514, 1, 0
        %v516 = vcvt.s32.f32 %v515
        %v517 = vrot.slane %v516, 4
        %v518 = vadd.f32 %v516, %v517
        %v519 = vrot.slane %v518, 2
        %v520 = vadd.f32 %v518, %v519
        %v521 = vrot.slane %v520, 1
        %v522 = vadd.f32 %v520, %v521
        %v523 = vadd.f32 %v522, 0.0
        %v524 = vrot.slane %v506, 4
        %v525 = vadd.f32 %v506, %v524
        %v526 = vrot.slane %v525, 2
        %v527 = vadd.f32 %v525, %v526
        %v528 = vrot.slane %v527, 1
        %v529 = vadd.f32 %v527, %v528
        %v530 = vadd.f32 %v529, 0.0
        %vm531 = vcmp.gt.f32.partialorder %v506, 0.0
        %v532 = vsel %vm531, 1, 0
        %v533 = vcvt.s32.f32 %v532
        %v534 = vrot.slane %v533, 4
        %v535 = vadd.f32 %v533, %v534
        %v536 = vrot.slane %v535, 2
        %v537 = vadd.f32 %v535, %v536
        %v538 = vrot.slane %v537, 1
        %v539 = vadd.f32 %v537, %v538
        %v540 = vadd.f32 %v539, 0.0
        %v541 = vadd.f32 %v499, %v500
        %v542 = vand.u32 2147483647, %v541
        %v543 = vrot.slane %v542, 4
        %v544 = vadd.f32 %v542, %v543
        %v545 = vrot.slane %v544, 2
        %v546 = vadd.f32 %v544, %v545
        %v547 = vrot.slane %v546, 1
        %v548 = vadd.f32 %v546, %v547
        %v549 = vadd.f32 %v548, 0.0
        %550 = vst [vmem:[%s387] sm:$0x1] %v471
        %551 = vst [vmem:[%s387 + $0x1] sm:$0x1] %v489
        %552 = vst [vmem:[%s387 + $0x2] sm:$0x1] %v513
        %553 = vst [vmem:[%s387 + $0x3] sm:$0x1] %v523
        %554 = vst [vmem:[%s387 + $0x4] sm:$0x1] %v530
        %555 = vst [vmem:[%s387 + $0x5] sm:$0x1] %v540
        %556 = vst [vmem:[%s387 + $0x6] sm:$0x1] %v549
        %s557 = sand.u32 %s166, 1
        %s558 = scalar_lea.sflag [#allocation4], %s557
        %s559 = sand.u32 %s166, 1
        %s560 = smul.addr %s559, 8
        %s561 = scalar_lea.vmem [#allocation11], %s560
        // Predicated region
        $region61: #{tpu_custom_call.1} parent=39 // pred_check
          %p562 = pneg %p176
        $region62: #{tpu_custom_call.1} parent=39 // pred_check_branch
          %564 = sbr.rel (%p562) target = $region64
        $region63: #{tpu_custom_call.1} parent=39 // pred_region
          %s566 = ssub.s32 128, 128
          %567 = vsyncadd %s558, %s566
          %s568 = smul.addr %s28, 128
          %s569 = scalar_lea.hbm %s5, %s568
          %s571 = sshll.u32 %s561, 4
          %s572 = int_to_ptr.vmem [resolvable:$true] %s571
          %574 = dma.vmem_to_hbm [thread:$0]  %s572, 128, %s569, %s558
        $region64: #{tpu_custom_call.1} parent=39 // pred_fallthru
          _
      $region40: #{tpu_custom_call.1} parent=5 // pred_fallthru
        _
      %p575 = scmp.le.s32.totalorder 2, %s23
      // Predicated region
      $region65: #{tpu_custom_call.1} parent=5 // pred_check
        %p576 = pneg %p575
      $region66: #{tpu_custom_call.1} parent=5 // pred_check_branch
        %578 = sbr.rel (%p576) target = $region68
      $region67: #{tpu_custom_call.1} parent=5 // pred_region
        %s579 = ssub.s32 %s23, 2
        // Predicated region
        $region69: #{tpu_custom_call.1} parent=67 // pred_check
          %p580 = pneg %p182
        $region70: #{tpu_custom_call.1} parent=67 // pred_check_branch
          %582 = sbr.rel (%p580) target = $region72
        $region71: #{tpu_custom_call.1} parent=67 // pred_region
          %s583 = sand.u32 %s167, 1
          %s584 = scalar_lea.sflag [#allocation4], %s583
          %s585 = sand.u32 %s167, 1
          %s586 = smul.addr %s585, 8
          %s587 = scalar_lea.vmem [#allocation11], %s586
          %588 = dma.done %s584, 128
        $region72: #{tpu_custom_call.1} parent=67 // pred_fallthru
          _
      $region68: #{tpu_custom_call.1} parent=5 // pred_fallthru
        _
    $region6: #{tpu_custom_call.1} parent=1 // loop_footer
      %s27 = sadd.s32 1, %s23
    $region7: #{tpu_custom_call.1} parent=1 // loop_footer_branch
      %22 = sbr.rel target = $region3
    $region8: #{tpu_custom_call.1} parent=1 // loop_exit
      _
    %589 = vsyncpa [#allocation3], 1
    %s590 = scalar_lea.sflag [#allocation3], 1
    %591 = vsyncpa %s590, 1
    %592 = vsyncpa [#allocation6], 1
    %s593 = scalar_lea.sflag [#allocation6], 1
    %594 = vsyncpa %s593, 1
    %595 = vsyncpa [#allocation9], 1
    %s596 = scalar_lea.sflag [#allocation9], 1
    %597 = vsyncpa %s596, 1
    %598 = vsyncpa [#allocation4], 1
    %s599 = scalar_lea.sflag [#allocation4], 1
    %600 = vsyncpa %s599, 1

</llo_original>
